<compile_context>
chip_gen: v7x
topology: tpu7x:2x2x1
jax: 0.10.0
libtpu: 0.0.40
codegen_flags: <defaults>
</compile_context>

<pallas_src>
import functools
import math

import jax
import jax.numpy as jnp
from jax.experimental import pallas as pl
from jax.experimental.pallas import tpu as pltpu


def _margin_distill_kernel(trig_ref, labels_ref, logits_ref, out_ref, *, scale, tc):
    j = pl.program_id(1)                                   # class-tile index (inner grid axis)

    x = logits_ref[...]                                    # (tb, tc), native dtype (no full-tile cast)

    # Single-compare mask: wrapper remapped -1 labels to the out-of-range sentinel C,
    # and we shift labels into tile-local coordinates instead of offsetting the iota.
    local_lab = labels_ref[...] - j * tc                   # (tb, 1) i32
    col_ids = jax.lax.broadcasted_iota(jnp.int32, x.shape, 1)
    sel = col_ids == local_lab                             # (tb, tc) bool

    # Per-row target logit via masked row reduce (XLU slot). Exact: <=1 nonzero per row.
    # Rows whose target is not in this tile (or ignored rows) get t=0; never selected below.
    zero = jnp.zeros((), x.dtype)
    t = jnp.sum(jnp.where(sel, x, zero), axis=-1, keepdims=True).astype(jnp.float32)  # (tb, 1)

    # Hoisted per-row trig (f32): [cos m, sin m, sin(m)*m]. Only sqrt stays in-kernel.
    tr = trig_ref[...]                                     # (tb, 3) f32
    cos_m = tr[:, 0:1]
    sin_m = tr[:, 1:2]
    sinmm = tr[:, 2:3]                                     # sin(pi - m) * m == sin(m) * m
    sin_t = jnp.sqrt(jnp.maximum(1.0 - t * t, 0.0))        # clamp = numerical guard (cosine logits)
    ctm = t * cos_m - sin_t * sin_m
    final = jnp.where(t > -cos_m, ctm, t - sinmm)          # theta = cos(pi - m) = -cos(m); easy_margin=False
    final = final.astype(x.dtype)                          # (tb, 1)

    out_ref[...] = jnp.where(sel, final, x) * jnp.array(scale, x.dtype)


def _pick_tile(n, align, cap):
    """Largest tile <= cap that is a multiple of `align` and divides n (else n itself)."""
    if n <= cap:
        return n
    t = (cap // align) * align
    while t >= align:
        if n % t == 0:
            return t
        t -= align
    # Fallback: full dim (awkward/prime n). May exceed the intended VMEM budget.
    return n


def _vmem_capacity_bytes(default=64 << 20):
    try:
        return int(pltpu.get_tpu_info().vmem_capacity_bytes)
    except Exception:
        return default   # conservative (v7x per-TC) fallback


def margin_distillation(margin, logits, labels, *, scale=64.0, max_tb=None, max_tc=None,
                        donate=True):
    """margin: [B] float, logits: [B, C] float (any dtype), labels: [B] int (-1 = ignore)."""
    B, C = logits.shape
    itemsize = jnp.dtype(logits.dtype).itemsize
    sublane_align = max(8, 32 // itemsize)        # 8 for f32, 16 for bf16, 32 for int8/fp8

    # Generation-aware block sizing: 2x double-buffered input + 2x output blocks ~ VMEM/2.
    vmem_cap = _vmem_capacity_bytes()
    blk_budget_bytes = vmem_cap // 8              # ~16 MiB on v5e/v6e (128 MiB), ~8 MiB on v7x (64 MiB)

    tc = _pick_tile(C, 128, max_tc if max_tc is not None else 4096)
    default_tb_cap = max(sublane_align, (blk_budget_bytes // itemsize) // max(tc, 1))
    tb = _pick_tile(B, sublane_align, max_tb if max_tb is not None else default_tb_cap)
    assert B % tb == 0 and C % tc == 0

    # Hoisted per-row trig: sin(pi - m) = sin(m), cos(pi - m) = -cos(m).
    m = margin.astype(jnp.float32)
    cos_m = jnp.cos(m)
    sin_m = jnp.sin(m)
    trig = jnp.stack([cos_m, sin_m, sin_m * m], axis=-1)                 # (B, 3) f32
    # Remap ignored rows (-1) to the out-of-range sentinel C -> single-compare mask in-kernel.
    labels2 = jnp.where(labels == -1, C, labels).astype(jnp.int32).reshape(B, 1)

    # VMEM accounting: 2x in + 2x out logits blocks, plus the lane-padded (tb,*) per-row blocks
    # (each pads to 128 lanes: tb*128*4 bytes per buffer, 2 buffers each for trig & labels).
    blk_bytes = tb * tc * itemsize
    perrow_bytes = 2 * 2 * tb * 128 * 4
    needed = 4 * blk_bytes + perrow_bytes + (2 << 20)
    vmem_limit = int(min(max(needed, 16 << 20), vmem_cap))

    kernel = functools.partial(_margin_distill_kernel, scale=float(scale), tc=tc)

    out = pl.pallas_call(
        kernel,
        out_shape=jax.ShapeDtypeStruct((B, C), logits.dtype),
        grid_spec=pltpu.PrefetchScalarGridSpec(
            num_scalar_prefetch=0,
            grid=(B // tb, C // tc),               # class axis innermost: per-row blocks not re-DMA'd
            in_specs=[
                pl.BlockSpec((tb, 3), lambda i, j: (i, 0)),    # packed trig (constant over class tiles)
                pl.BlockSpec((tb, 1), lambda i, j: (i, 0)),    # labels     (constant over class tiles)
                pl.BlockSpec((tb, tc), lambda i, j: (i, j)),   # logits
            ],
            out_specs=pl.BlockSpec((tb, tc), lambda i, j: (i, j)),
        ),
        compiler_params=pltpu.CompilerParams(
            # Rows "parallel" so v7x megacore splits whole row tiles; class axis stays core-local.
            dimension_semantics=("parallel", "arbitrary"),
            vmem_limit_bytes=vmem_limit,
        ),
        # In-place semantics like the PyTorch module; donated buffer -> no extra copy.
        input_output_aliases={2: 0} if donate else {},
    )(trig, labels2, logits)
    return out


def _reference(margin, logits, labels, scale=64.0):
    """Pure-JAX reference mirroring the PyTorch forward."""
    x = logits.astype(jnp.float32)
    B, C = x.shape
    col_ids = jnp.arange(C)[None, :]
    sel = (col_ids == labels[:, None]) & (labels[:, None] != -1)
    m = margin[:, None].astype(jnp.float32)
    t = x
    cos_m, sin_m = jnp.cos(m), jnp.sin(m)
    theta = jnp.cos(math.pi - m)
    sinmm = jnp.sin(math.pi - m) * m
    sin_t = jnp.sqrt(jnp.maximum(1.0 - t * t, 0.0))
    ctm = t * cos_m - sin_t * sin_m
    final = jnp.where(t > theta, ctm, t - sinmm)
    return (jnp.where(sel, final, x) * scale).astype(logits.dtype)


if __name__ == "__main__":
    SCALE = 64.0   # module __init__ parameter s=64.0 (deterministic, no checkpoint)

    key = jax.random.PRNGKey(0)

    # --- Test 1: single-block case (B=8, C=128), f32 ---
    B, C = 8, 128
    k1, k2, k3 = jax.random.split(key, 3)
    logits = jax.random.uniform(k1, (B, C), jnp.float32, minval=-0.99, maxval=0.99)
    margin = jax.random.uniform(k2, (B,), jnp.float32, minval=0.2, maxval=0.6)
    labels = jax.random.randint(k3, (B,), 0, C, jnp.int32)
    labels = labels.at[2].set(-1).at[5].set(-1)

    ref = _reference(margin, logits, labels, scale=SCALE)
    out = jax.block_until_ready(margin_distillation(margin, logits, labels, scale=SCALE))
    assert jnp.allclose(out, ref, atol=1e-4, rtol=1e-4), "mismatch vs reference (test 1)"

    # --- Test 2: force a 2x2 grid so the class-tile label-offset path is exercised ---
    B2, C2 = 16, 256
    k4, k5, k6 = jax.random.split(jax.random.PRNGKey(1), 3)
    logits2 = jax.random.uniform(k4, (B2, C2), jnp.float32, minval=-0.99, maxval=0.99)
    margin2 = jax.random.uniform(k5, (B2,), jnp.float32, minval=0.2, maxval=0.6)
    labels2 = jax.random.randint(k6, (B2,), 0, C2, jnp.int32)
    labels2 = labels2.at[0].set(-1).at[7].set(-1).at[13].set(-1)

    ref2 = _reference(margin2, logits2, labels2, scale=SCALE)
    out2 = jax.block_until_ready(
        margin_distillation(margin2, logits2, labels2, scale=SCALE, max_tb=8, max_tc=128))
    assert jnp.allclose(out2, ref2, atol=1e-4, rtol=1e-4), "mismatch vs reference (test 2)"

    # --- Test 3: bf16 logits (native-dtype full-tile path, no full-tile f32 cast) ---
    B3, C3 = 16, 256
    k7, k8, k9 = jax.random.split(jax.random.PRNGKey(2), 3)
    logits3 = jax.random.uniform(k7, (B3, C3), jnp.float32,
                                 minval=-0.99, maxval=0.99).astype(jnp.bfloat16)
    margin3 = jax.random.uniform(k8, (B3,), jnp.float32, minval=0.2, maxval=0.6)
    labels3 = jax.random.randint(k9, (B3,), 0, C3, jnp.int32).at[3].set(-1)

    ref3 = _reference(margin3, logits3, labels3, scale=SCALE).astype(jnp.float32)
    out3 = jax.block_until_ready(
        margin_distillation(margin3, logits3, labels3, scale=SCALE)).astype(jnp.float32)
    assert jnp.allclose(out3, ref3, atol=0.5, rtol=0.02), "mismatch vs reference (test 3, bf16)"

    print("KERNEL_OK")
</pallas_src>

<mosaic_0001>
module attributes {stable_mosaic.version = 11 : i64} {
  func.func @_margin_distill_kernel(%arg0: i32, %arg1: i32, %arg2: memref<8x3xf32, #tpu.memory_space<vmem>>, %arg3: memref<8x1xi32, #tpu.memory_space<vmem>>, %arg4: memref<8x128xf32, #tpu.memory_space<vmem>>, %arg5: memref<8x128xf32, #tpu.memory_space<vmem>>) attributes {dimension_semantics = [#tpu.dimension_semantics<parallel>, #tpu.dimension_semantics<arbitrary>], iteration_bounds = array<i64: 1, 1>, scalar_prefetch = 0 : i64, scratch_operands = 0 : i64, tpu.core_type = #tpu.core_type<tc>, window_params = [{transform_indices = @transform_0, window_bounds = array<i64: 8, 3>}, {transform_indices = @transform_1, window_bounds = array<i64: 8, 1>}, {transform_indices = @transform_2, window_bounds = array<i64: 8, 128>}, {transform_indices = @transform_3, window_bounds = array<i64: 8, 128>}]} {
    %c0 = arith.constant 0 : index
    %c0_0 = arith.constant 0 : index
    %0 = vector.load %arg4[%c0, %c0_0] : memref<8x128xf32, #tpu.memory_space<vmem>>, vector<8x128xf32>
    %c0_1 = arith.constant 0 : index
    %c0_2 = arith.constant 0 : index
    %1 = vector.load %arg3[%c0_1, %c0_2] : memref<8x1xi32, #tpu.memory_space<vmem>>, vector<8x1xi32>
    %c128_i32 = arith.constant 128 : i32
    %2 = arith.muli %arg1, %c128_i32 : i32
    %3 = vector.broadcast %2 : i32 to vector<8x1xi32>
    %4 = arith.subi %1, %3 : vector<8x1xi32>
    %5 = tpu.iota {dimensions = array<i32: 1>} : vector<8x128xi32>
    %6 = vector.broadcast %4 : vector<8x1xi32> to vector<8x128xi32>
    %7 = arith.cmpi eq, %5, %6 : vector<8x128xi32>
    %cst = arith.constant 0.000000e+00 : f32
    %8 = vector.broadcast %cst : f32 to vector<8x128xf32>
    %9 = arith.select %7, %0, %8 : vector<8x128xi1>, vector<8x128xf32>
    %cst_3 = arith.constant dense<0.000000e+00> : vector<8xf32>
    %10 = vector.multi_reduction <add>, %9, %cst_3 [1] : vector<8x128xf32> to vector<8xf32>
    %11 = vector.shape_cast %10 : vector<8xf32> to vector<8x1xf32>
    %c0_4 = arith.constant 0 : index
    %c0_5 = arith.constant 0 : index
    %12 = vector.load %arg2[%c0_4, %c0_5] : memref<8x3xf32, #tpu.memory_space<vmem>>, vector<8x3xf32>
    %13 = vector.extract_strided_slice %12 {offsets = [0, 0], sizes = [8, 1], strides = [1, 1]} : vector<8x3xf32> to vector<8x1xf32>
    %14 = vector.extract_strided_slice %12 {offsets = [0, 1], sizes = [8, 1], strides = [1, 1]} : vector<8x3xf32> to vector<8x1xf32>
    %15 = vector.extract_strided_slice %12 {offsets = [0, 2], sizes = [8, 1], strides = [1, 1]} : vector<8x3xf32> to vector<8x1xf32>
    %16 = arith.mulf %11, %11 : vector<8x1xf32>
    %cst_6 = arith.constant 1.000000e+00 : f32
    %17 = vector.broadcast %cst_6 : f32 to vector<8x1xf32>
    %18 = arith.subf %17, %16 : vector<8x1xf32>
    %cst_7 = arith.constant 0.000000e+00 : f32
    %19 = vector.broadcast %cst_7 : f32 to vector<8x1xf32>
    %20 = arith.maximumf %18, %19 : vector<8x1xf32>
    %21 = math.sqrt %20 : vector<8x1xf32>
    %22 = arith.mulf %11, %13 : vector<8x1xf32>
    %23 = arith.mulf %21, %14 : vector<8x1xf32>
    %24 = arith.subf %22, %23 : vector<8x1xf32>
    %cst_8 = arith.constant 0.000000e+00 : f32
    %25 = vector.broadcast %cst_8 : f32 to vector<8x1xf32>
    %26 = arith.subf %25, %13 : vector<8x1xf32>
    %27 = arith.cmpf ogt, %11, %26 : vector<8x1xf32>
    %28 = arith.subf %11, %15 : vector<8x1xf32>
    %29 = arith.select %27, %24, %28 : vector<8x1xi1>, vector<8x1xf32>
    %30 = vector.shape_cast %29 : vector<8x1xf32> to vector<8x1xf32>
    %31 = vector.broadcast %30 : vector<8x1xf32> to vector<8x128xf32>
    %32 = arith.select %7, %31, %0 : vector<8x128xi1>, vector<8x128xf32>
    %cst_9 = arith.constant 6.400000e+01 : f32
    %33 = vector.broadcast %cst_9 : f32 to vector<8x128xf32>
    %34 = arith.mulf %32, %33 : vector<8x128xf32>
    %c0_10 = arith.constant 0 : index
    %c0_11 = arith.constant 0 : index
    %35 = vector.load %arg5[%c0_10, %c0_11] : memref<8x128xf32, #tpu.memory_space<vmem>>, vector<8x128xf32>
    tpu.vector_store %arg5[%c0_10, %c0_11], %34 {strides = array<i32>} : memref<8x128xf32, #tpu.memory_space<vmem>>, vector<8x128xf32>,
    return
  }
  func.func @transform_0(%arg0: i32, %arg1: i32) -> (i32, i32) {
    %c0_i32 = arith.constant 0 : i32
    %c0_i32_0 = arith.constant 0 : i32
    return %arg0, %c0_i32 : i32, i32
  }
  func.func @transform_1(%arg0: i32, %arg1: i32) -> (i32, i32) {
    %c0_i32 = arith.constant 0 : i32
    %c0_i32_0 = arith.constant 0 : i32
    return %arg0, %c0_i32 : i32, i32
  }
  func.func @transform_2(%arg0: i32, %arg1: i32) -> (i32, i32) {
    %c0_i32 = arith.constant 0 : i32
    return %arg0, %arg1 : i32, i32
  }
  func.func @transform_3(%arg0: i32, %arg1: i32) -> (i32, i32) {
    %c0_i32 = arith.constant 0 : i32
    return %arg0, %arg1 : i32, i32
  }
}

</mosaic_0001>

<llo_original>
// kernel: tpu_custom_call.1
$region0: #{tpu_custom_call.1}
  #allocation0 [shape = 'u32[]', space=smem, size = 0x4, offset = 0x4, fixed_abs, tag = 'smem constant byte address 0x4 - core index']
  #allocation1 [shape = 'u32[144,128]{1,0:T(1,128)}', space=vmem, size = 0x12000, scoped, tag = 'internal scratch']
  %s0 = inlined_call_operand.vmem [shape: f32[8,3], index: 0, kind: input, shape index: {}]
  %s1 = inlined_call_operand.vmem [shape: s32[8,1], index: 1, kind: input, shape index: {}]
  %s2 = inlined_call_operand.hbm [shape: f32[8,128], index: 2, kind: input, shape index: {}, may-alias: {2,3}]
  %s3 = inlined_call_operand.hbm [shape: f32[8,128], index: 3, kind: output, shape index: {}, may-alias: {2,3}]
  %s4 = sld [smem:[#allocation0]]
  $region26: #{tpu_custom_call.1} parent=0
    _
  %s6 = ssub.s32 1, %s4
  %s7 = scalar_select 0, %s6, %s4
  $region1: #{tpu_custom_call.1} parent=0
    #allocation2 [shape = 'u8[4096]{0}', space=vmem, size = 0x1000, scoped, tag = 'input window, operand 2, single buffered']
    #allocation3 [shape = 's32[1]{0}', space=sflag, size = 0x4, scoped, tag = 'scoped memory for tpu_custom_call.1']
    #allocation4 [shape = 's32[1]{0}', space=sflag, size = 0x4, scoped, tag = 'scoped memory for tpu_custom_call.1']
    #allocation5 [shape = 'u8[4096]{0}', space=vmem, size = 0x1000, scoped, tag = 'output window, operand 0, single buffered']
    %8 = vsyncpa [#allocation3], 0
    %9 = vsyncpa [#allocation4], 0
    // Predicated region
    $region2: #{tpu_custom_call.1} parent=1 // pred_check
      _
    $region3: #{tpu_custom_call.1} parent=1 // pred_check_branch
      %11 = sbr.rel (0) target = $region5
    $region4: #{tpu_custom_call.1} parent=1 // pred_region
      _
    $region5: #{tpu_custom_call.1} parent=1 // pred_fallthru
      _
    // Predicated region
    $region6: #{tpu_custom_call.1} parent=1 // pred_check
      _
    $region7: #{tpu_custom_call.1} parent=1 // pred_check_branch
      %13 = sbr.rel (0) target = $region9
    $region8: #{tpu_custom_call.1} parent=1 // pred_region
      _
    $region9: #{tpu_custom_call.1} parent=1 // pred_fallthru
      _
    // Predicated region
    $region10: #{tpu_custom_call.1} parent=1 // pred_check
      _
    $region11: #{tpu_custom_call.1} parent=1 // pred_check_branch
      %15 = sbr.rel (0) target = $region13
    $region12: #{tpu_custom_call.1} parent=1 // pred_region
      %s17 = ssub.s32 128, 128
      %18 = vsyncadd [#allocation3], %s17
      %s20 = sshll.u32 [#allocation2], 4
      %s21 = int_to_ptr.vmem [resolvable:$true] %s20
      %23 = dma.hbm_to_vmem [thread:$0]  %s2, 128, %s21, [#allocation3]
    $region13: #{tpu_custom_call.1} parent=1 // pred_fallthru
      _
    // Predicated region
    $region14: #{tpu_custom_call.1} parent=1 // pred_check
      _
    $region15: #{tpu_custom_call.1} parent=1 // pred_check_branch
      %25 = sbr.rel (0) target = $region17
    $region16: #{tpu_custom_call.1} parent=1 // pred_region
      %26 = dma.done [#allocation3], 128
    $region17: #{tpu_custom_call.1} parent=1 // pred_fallthru
      _
    %v27 = vld [vmem:[#allocation2] sm:$0xff]
    %v28 = vld [vmem:[%s1] sm:$0xff]
    %s29 = smul.u32 0, 128
    %v30 = vstv %s29
    %v31 = vsub.s32 %v28, %v30
    %v32 = vlaneseq
    %v33 = vand.u32 %v32, 127
    %34 = vset.pattern.permute.xlu0 0
    %35 = vperm.xlu0 %34, %v31
    %v36 = vpop.permute.xlu0 %35
    %vm37 = vcmp.eq.s32.totalorder %v33, %v36
    %v38 = vsel %vm37, %v27, 0.0
    %39 = vadd.xlane.f32.xlu0 %v38
    %v40 = vpop.xlane.xlu0 %39
    %v41 = vld [vmem:[%s0] sm:$0xff]
    %v42 = vmul.f32 %v40, %v40
    %v43 = vsub.f32 1.0, %v42
    %v44 = vmax.f32 %v43, 0.0
    %v45 = vrsqrt.pop %v44
    %v46 = vmul.f32 %v44, %v45
    %vm47 = vcmp.eq.f32.partialorder %v44, inf
    %v48 = vsel %vm47, %v44, %v46
    %vm49 = vcmp.eq.f32.partialorder %v44, 0.0
    %v50 = vand.u32 %v44, 2147483648
    %v51 = vsel %vm49, %v50, %v48
    %v52 = vmul.f32 %v40, %v41
    %v53 = vmul.f32 %v51, %v41
    %55 = vrot.lane.b32.xlu0 %v53, 127
    %v56 = vpop.permute.xlu0 %55
    %v58 = vsub.f32 %v52, %v56
    %v59 = vsub.f32 0.0, %v41
    %vm60 = vcmp.gt.f32.partialorder %v40, %v59
    %v61 = vsub.f32 %v40, %v41
    %63 = vrot.lane.b32.xlu0 %v61, 126
    %v64 = vpop.permute.xlu0 %63
    %v66 = vsel %vm60, %v58, %v64
    %68 = vset.pattern.permute.xlu0 0
    %69 = vperm.xlu0 %68, %v66
    %v70 = vpop.permute.xlu0 %69
    %v72 = vsel %vm37, %v70, %v27
    %v73 = vmul.f32 %v72, 64.0
    %74 = vst [vmem:[#allocation5] sm:$0xff] %v73
    // Predicated region
    $region18: #{tpu_custom_call.1} parent=1 // pred_check
      _
    $region19: #{tpu_custom_call.1} parent=1 // pred_check_branch
      %76 = sbr.rel (0) target = $region21
    $region20: #{tpu_custom_call.1} parent=1 // pred_region
      %s78 = ssub.s32 128, 128
      %79 = vsyncadd [#allocation4], %s78
      %s81 = sshll.u32 [#allocation5], 4
      %s82 = int_to_ptr.vmem [resolvable:$true] %s81
      %84 = dma.vmem_to_hbm [thread:$0]  %s82, 128, %s3, [#allocation4]
    $region21: #{tpu_custom_call.1} parent=1 // pred_fallthru
      _
    // Predicated region
    $region22: #{tpu_custom_call.1} parent=1 // pred_check
      _
    $region23: #{tpu_custom_call.1} parent=1 // pred_check_branch
      %86 = sbr.rel (0) target = $region25
    $region24: #{tpu_custom_call.1} parent=1 // pred_region
      %87 = dma.done [#allocation4], 128
    $region25: #{tpu_custom_call.1} parent=1 // pred_fallthru
      _
    %88 = vsyncpa [#allocation3], 1
    %89 = vsyncpa [#allocation4], 1

</llo_original>
